<compile_context>
chip_gen: v6e
topology: v6e:2x2x1
jax: 0.10.0
libtpu: 0.0.40
codegen_flags: <defaults>
</compile_context>

<pallas_src>
import functools
import math

import jax
import jax.numpy as jnp
from jax import lax
from jax.experimental import pallas as pl
from jax.experimental.pallas import tpu as pltpu


def _round_up(x, m):
    return ((x + m - 1) // m) * m


def _pick_tile(dim, target):
    """Largest multiple of 128 that divides `dim` (a multiple of 128) and is <= target."""
    best = 128
    t = 128
    while t <= min(dim, target):
        if dim % t == 0:
            best = t
        t += 128
    return best


def _noisy_linear_kernel(x_ref, muw_ref, sw_ref, ew_ref, b3_ref, o_ref, acc_ref):
    k = pl.program_id(1)

    @pl.when(k == 0)
    def _init():
        acc_ref[...] = jnp.zeros_like(acc_ref)

    # Noisy weight tile on the VPU, then a transpose-free contraction on the MXU:
    # x (B, tk) contracted on axis 1 with w (tn, tk) contracted on axis 1 -> (B, tn).
    w = muw_ref[...] + sw_ref[...] * ew_ref[...]
    acc_ref[...] += lax.dot_general(
        x_ref[...], w,
        dimension_numbers=(((1,), (1,)), ((), ())),
        preferred_element_type=jnp.float32)

    @pl.when(k == pl.num_programs(1) - 1)
    def _finalize():
        b3 = b3_ref[...]                                   # (3, tn): [mu_b; sigma_b; eps_b]
        b = b3[0:1, :] + b3[1:2, :] * b3[2:3, :]           # (1, tn) noisy bias
        o_ref[...] = (acc_ref[...] + b).astype(o_ref.dtype)


@functools.partial(jax.jit, static_argnames=("tn_target", "tk_target"))
def noisy_linear(x, mu_weight, sigma_weight, eps_weight,
                 mu_bias, sigma_bias, eps_bias, *, tn_target=512, tk_target=512):
    """y = x @ (mu_w + sigma_w*eps_w).T + (mu_b + sigma_b*eps_b)"""
    batch, num_in = x.shape
    num_out = mu_weight.shape[0]

    # Pad to TPU-friendly (8, 128)-aligned shapes. Zero padding is exact:
    # padded K columns contribute 0 to the dot, padded N columns are sliced off.
    b_pad = _round_up(batch, 8)
    k_pad = _round_up(num_in, 128)
    n_pad = _round_up(num_out, 128)
    tk = _pick_tile(k_pad, tk_target)
    tn = _pick_tile(n_pad, tn_target)

    x_p = jnp.pad(x, ((0, b_pad - batch), (0, k_pad - num_in)))
    pad_w = ((0, n_pad - num_out), (0, k_pad - num_in))
    muw_p = jnp.pad(mu_weight, pad_w)
    sw_p = jnp.pad(sigma_weight, pad_w)
    ew_p = jnp.pad(eps_weight, pad_w)
    # Pack the three bias vectors into one (3, n_pad) tile -> single small DMA per step.
    bias3 = jnp.pad(jnp.stack([mu_bias, sigma_bias, eps_bias]),
                    ((0, 0), (0, n_pad - num_out)))

    grid = (n_pad // tn, k_pad // tk)   # (N tiles, K tiles) -- reduction axis last

    out = pl.pallas_call(
        _noisy_linear_kernel,
        out_shape=jax.ShapeDtypeStruct((b_pad, n_pad), x.dtype),
        grid_spec=pltpu.PrefetchScalarGridSpec(
            num_scalar_prefetch=0,
            grid=grid,
            in_specs=[
                pl.BlockSpec((b_pad, tk), lambda j, k: (0, k)),   # x
                pl.BlockSpec((tn, tk), lambda j, k: (j, k)),      # mu_w
                pl.BlockSpec((tn, tk), lambda j, k: (j, k)),      # sigma_w
                pl.BlockSpec((tn, tk), lambda j, k: (j, k)),      # eps_w
                pl.BlockSpec((3, tn), lambda j, k: (0, j)),       # packed bias
            ],
            out_specs=pl.BlockSpec((b_pad, tn), lambda j, k: (0, j)),
            scratch_shapes=[pltpu.VMEM((b_pad, tn), jnp.float32)],
        ),
        compiler_params=pltpu.CompilerParams(
            dimension_semantics=("parallel", "arbitrary")),
    )(x_p, muw_p, sw_p, ew_p, bias3)

    return out[:batch, :num_out]


def reference(x, mu_weight, sigma_weight, eps_weight, mu_bias, sigma_bias, eps_bias,
              precision=None):
    w = mu_weight + sigma_weight * eps_weight
    b = mu_bias + sigma_bias * eps_bias
    return jnp.dot(x, w.T, precision=precision) + b


if __name__ == "__main__":
    dtype = jnp.float32
    key = jax.random.PRNGKey(0)

    def make_inputs(key, batch, num_in, num_out):
        k_x, k_muw, k_mub, k_ew, k_eb = jax.random.split(key, 5)
        # reset_parameters(): mu ~ U(-std, std), std = sqrt(3/num_in); sigma = 0.017.
        std = math.sqrt(3.0 / num_in)
        mu_weight = jax.random.uniform(k_muw, (num_out, num_in), dtype, -std, std)
        mu_bias = jax.random.uniform(k_mub, (num_out,), dtype, -std, std)
        sigma_weight = jnp.full((num_out, num_in), 0.017, dtype)
        sigma_bias = jnp.full((num_out,), 0.017, dtype)
        # reset_noise(): epsilon ~ N(0, 1) (deterministic here for reproducibility).
        eps_weight = jax.random.normal(k_ew, (num_out, num_in), dtype)
        eps_bias = jax.random.normal(k_eb, (num_out,), dtype)
        x = jax.random.normal(k_x, (batch, num_in), dtype)
        return x, mu_weight, sigma_weight, eps_weight, mu_bias, sigma_bias, eps_bias

    # Small shapes consistent with a NoisyLinear(num_in=32, num_out=16) layer.
    args_small = make_inputs(key, batch=8, num_in=32, num_out=16)
    y = jax.block_until_ready(noisy_linear(*args_small))
    y_ref = reference(*args_small, precision=lax.Precision.HIGHEST)
    assert y.shape == (8, 16)
    assert jnp.allclose(y, y_ref, atol=1e-5, rtol=1e-5), "small-shape mismatch vs reference"

    # Larger, non-aligned shapes to exercise the tiled grid + K accumulation + padding.
    key2 = jax.random.PRNGKey(1)
    args_big = make_inputs(key2, batch=16, num_in=1000, num_out=600)
    y2 = jax.block_until_ready(noisy_linear(*args_big))
    y2_ref = reference(*args_big, precision=lax.Precision.HIGHEST)
    assert y2.shape == (16, 600)
    assert jnp.allclose(y2, y2_ref, atol=1e-3, rtol=1e-4), "tiled-shape mismatch vs reference"

    print("KERNEL_OK")
</pallas_src>

<mosaic_0001>
module attributes {stable_mosaic.version = 11 : i64} {
  func.func @_noisy_linear_kernel(%arg0: i32, %arg1: i32, %arg2: memref<8x128xf32, #tpu.memory_space<vmem>>, %arg3: memref<128x128xf32, #tpu.memory_space<vmem>>, %arg4: memref<128x128xf32, #tpu.memory_space<vmem>>, %arg5: memref<128x128xf32, #tpu.memory_space<vmem>>, %arg6: memref<3x128xf32, #tpu.memory_space<vmem>>, %arg7: memref<8x128xf32, #tpu.memory_space<vmem>>, %arg8: memref<8x128xf32, #tpu.memory_space<vmem>>) attributes {dimension_semantics = [#tpu.dimension_semantics<parallel>, #tpu.dimension_semantics<arbitrary>], iteration_bounds = array<i64: 1, 1>, scalar_prefetch = 0 : i64, scratch_operands = 1 : i64, tpu.core_type = #tpu.core_type<tc>, window_params = [{transform_indices = @transform_0, window_bounds = array<i64: 8, 128>}, {transform_indices = @transform_1, window_bounds = array<i64: 128, 128>}, {transform_indices = @transform_2, window_bounds = array<i64: 128, 128>}, {transform_indices = @transform_3, window_bounds = array<i64: 128, 128>}, {transform_indices = @transform_4, window_bounds = array<i64: 3, 128>}, {transform_indices = @transform_5, window_bounds = array<i64: 8, 128>}]} {
    %c0_i32 = arith.constant 0 : i32
    %0 = arith.cmpi eq, %arg1, %c0_i32 : i32
    %1 = arith.extui %0 : i1 to i32
    %c0_i32_0 = arith.constant 0 : i32
    %2 = arith.cmpi ne, %1, %c0_i32_0 : i32
    scf.if %2 {
      %cst_14 = arith.constant 0.000000e+00 : f32
      %16 = vector.broadcast %cst_14 : f32 to vector<8x128xf32>
      %c0_15 = arith.constant 0 : index
      %c0_16 = arith.constant 0 : index
      %17 = vector.load %arg8[%c0_15, %c0_16] : memref<8x128xf32, #tpu.memory_space<vmem>>, vector<8x128xf32>
      tpu.vector_store %arg8[%c0_15, %c0_16], %16 {strides = array<i32>} : memref<8x128xf32, #tpu.memory_space<vmem>>, vector<8x128xf32>,
    } else {
    }
    %c0 = arith.constant 0 : index
    %c0_1 = arith.constant 0 : index
    %3 = vector.load %arg3[%c0, %c0_1] : memref<128x128xf32, #tpu.memory_space<vmem>>, vector<128x128xf32>
    %c0_2 = arith.constant 0 : index
    %c0_3 = arith.constant 0 : index
    %4 = vector.load %arg4[%c0_2, %c0_3] : memref<128x128xf32, #tpu.memory_space<vmem>>, vector<128x128xf32>
    %c0_4 = arith.constant 0 : index
    %c0_5 = arith.constant 0 : index
    %5 = vector.load %arg5[%c0_4, %c0_5] : memref<128x128xf32, #tpu.memory_space<vmem>>, vector<128x128xf32>
    %6 = arith.mulf %4, %5 : vector<128x128xf32>
    %7 = arith.addf %3, %6 : vector<128x128xf32>
    %c0_6 = arith.constant 0 : index
    %c0_7 = arith.constant 0 : index
    %8 = vector.load %arg8[%c0_6, %c0_7] : memref<8x128xf32, #tpu.memory_space<vmem>>, vector<8x128xf32>
    %c0_8 = arith.constant 0 : index
    %c0_9 = arith.constant 0 : index
    %9 = vector.load %arg2[%c0_8, %c0_9] : memref<8x128xf32, #tpu.memory_space<vmem>>, vector<8x128xf32>
    %cst = arith.constant dense<0.000000e+00> : vector<8x128xf32>
    %10 = tpu.matmul %9, %7, %cst {dimension_numbers = #tpu.dot_dimension_numbers<[1], [1], [0], [0], [0, 0, 1, 0], [], []>} : vector<8x128xf32>, vector<128x128xf32>, vector<8x128xf32> -> vector<8x128xf32>
    %11 = arith.addf %8, %10 : vector<8x128xf32>
    %c0_10 = arith.constant 0 : index
    %c0_11 = arith.constant 0 : index
    %12 = vector.load %arg8[%c0_10, %c0_11] : memref<8x128xf32, #tpu.memory_space<vmem>>, vector<8x128xf32>
    tpu.vector_store %arg8[%c0_10, %c0_11], %11 {strides = array<i32>} : memref<8x128xf32, #tpu.memory_space<vmem>>, vector<8x128xf32>,
    %c0_i32_12 = arith.constant 0 : i32
    %13 = arith.cmpi eq, %arg1, %c0_i32_12 : i32
    %14 = arith.extui %13 : i1 to i32
    %c0_i32_13 = arith.constant 0 : i32
    %15 = arith.cmpi ne, %14, %c0_i32_13 : i32
    scf.if %15 {
      %c0_14 = arith.constant 0 : index
      %c0_15 = arith.constant 0 : index
      %16 = vector.load %arg6[%c0_14, %c0_15] : memref<3x128xf32, #tpu.memory_space<vmem>>, vector<3x128xf32>
      %17 = vector.extract_strided_slice %16 {offsets = [0, 0], sizes = [1, 128], strides = [1, 1]} : vector<3x128xf32> to vector<1x128xf32>
      %18 = vector.extract_strided_slice %16 {offsets = [1, 0], sizes = [1, 128], strides = [1, 1]} : vector<3x128xf32> to vector<1x128xf32>
      %19 = vector.extract_strided_slice %16 {offsets = [2, 0], sizes = [1, 128], strides = [1, 1]} : vector<3x128xf32> to vector<1x128xf32>
      %20 = arith.mulf %18, %19 : vector<1x128xf32>
      %21 = arith.addf %17, %20 : vector<1x128xf32>
      %c0_16 = arith.constant 0 : index
      %c0_17 = arith.constant 0 : index
      %22 = vector.load %arg8[%c0_16, %c0_17] : memref<8x128xf32, #tpu.memory_space<vmem>>, vector<8x128xf32>
      %23 = vector.broadcast %21 : vector<1x128xf32> to vector<8x128xf32>
      %24 = arith.addf %22, %23 : vector<8x128xf32>
      %c0_18 = arith.constant 0 : index
      %c0_19 = arith.constant 0 : index
      %25 = vector.load %arg7[%c0_18, %c0_19] : memref<8x128xf32, #tpu.memory_space<vmem>>, vector<8x128xf32>
      tpu.vector_store %arg7[%c0_18, %c0_19], %24 {strides = array<i32>} : memref<8x128xf32, #tpu.memory_space<vmem>>, vector<8x128xf32>,
    } else {
    }
    return
  }
  func.func @transform_0(%arg0: i32, %arg1: i32) -> (i32, i32) {
    %c0_i32 = arith.constant 0 : i32
    %c0_i32_0 = arith.constant 0 : i32
    return %c0_i32, %arg1 : i32, i32
  }
  func.func @transform_1(%arg0: i32, %arg1: i32) -> (i32, i32) {
    %c0_i32 = arith.constant 0 : i32
    return %arg0, %arg1 : i32, i32
  }
  func.func @transform_2(%arg0: i32, %arg1: i32) -> (i32, i32) {
    %c0_i32 = arith.constant 0 : i32
    return %arg0, %arg1 : i32, i32
  }
  func.func @transform_3(%arg0: i32, %arg1: i32) -> (i32, i32) {
    %c0_i32 = arith.constant 0 : i32
    return %arg0, %arg1 : i32, i32
  }
  func.func @transform_4(%arg0: i32, %arg1: i32) -> (i32, i32) {
    %c0_i32 = arith.constant 0 : i32
    %c0_i32_0 = arith.constant 0 : i32
    return %c0_i32, %arg0 : i32, i32
  }
  func.func @transform_5(%arg0: i32, %arg1: i32) -> (i32, i32) {
    %c0_i32 = arith.constant 0 : i32
    %c0_i32_0 = arith.constant 0 : i32
    return %c0_i32, %arg0 : i32, i32
  }
}

</mosaic_0001>

<llo_original>
// kernel: noisy_linear.1
$region0: #{noisy_linear.1}
  #allocation0 [shape = 'u32[]', space=smem, size = 0x4, offset = 0x4, fixed_abs, tag = 'smem constant byte address 0x4 - core index']
  #allocation1 [shape = 'u32[144,128]{1,0:T(1,128)}', space=vmem, size = 0x12000, scoped, tag = 'internal scratch']
  #allocation2 [shape = 'f32[8,128]{1,0:T(8,128)}', space=vmem, size = 0x1000, scoped, tag = 'scratch operand']
  %s0 = inlined_call_operand.vmem [shape: f32[8,128], index: 0, kind: input, shape index: {}]
  %s1 = inlined_call_operand.vmem [shape: f32[128,128], index: 1, kind: input, shape index: {}]
  %s2 = inlined_call_operand.vmem [shape: f32[128,128], index: 2, kind: input, shape index: {}]
  %s3 = inlined_call_operand.vmem [shape: f32[128,128], index: 3, kind: input, shape index: {}]
  %s4 = inlined_call_operand.vmem [shape: f32[3,128], index: 4, kind: input, shape index: {}]
  %s5 = inlined_call_operand.hbm [shape: f32[8,128], index: 5, kind: output, shape index: {}]
  %s6 = sld [smem:[#allocation0]]
  $region38: #{noisy_linear.1} parent=0
    _
  %s8 = ssub.s32 1, %s6
  %s9 = scalar_select 0, %s8, %s6
  $region1: #{noisy_linear.1} parent=0
    #allocation3 [shape = 'u8[4096]{0}', space=vmem, size = 0x1000, scoped, tag = 'output window, operand 0, single buffered']
    #allocation4 [shape = 's32[1]{0}', space=sflag, size = 0x4, scoped, tag = 'scoped memory for noisy_linear.1']
    %10 = vsyncpa [#allocation4], 0
    // Predicated region
    $region2: #{noisy_linear.1} parent=1 // pred_check
      _
    $region3: #{noisy_linear.1} parent=1 // pred_check_branch
      %12 = sbr.rel (0) target = $region5
    $region4: #{noisy_linear.1} parent=1 // pred_region
      _
    $region5: #{noisy_linear.1} parent=1 // pred_fallthru
      _
    // Predicated region
    $region6: #{noisy_linear.1} parent=1 // pred_check
      _
    $region7: #{noisy_linear.1} parent=1 // pred_check_branch
      %14 = sbr.rel (0) target = $region9
    $region8: #{noisy_linear.1} parent=1 // pred_region
      _
    $region9: #{noisy_linear.1} parent=1 // pred_fallthru
      _
    // Predicated region
    $region10: #{noisy_linear.1} parent=1 // pred_check
      _
    $region11: #{noisy_linear.1} parent=1 // pred_check_branch
      %16 = sbr.rel (0) target = $region13
    $region12: #{noisy_linear.1} parent=1 // pred_region
      _
    $region13: #{noisy_linear.1} parent=1 // pred_fallthru
      _
    // Predicated region
    $region14: #{noisy_linear.1} parent=1 // pred_check
      _
    $region15: #{noisy_linear.1} parent=1 // pred_check_branch
      %18 = sbr.rel (0) target = $region17
    $region16: #{noisy_linear.1} parent=1 // pred_region
      _
    $region17: #{noisy_linear.1} parent=1 // pred_fallthru
      _
    // Predicated region
    $region18: #{noisy_linear.1} parent=1 // pred_check
      _
    $region19: #{noisy_linear.1} parent=1 // pred_check_branch
      %20 = sbr.rel (0) target = $region21
    $region20: #{noisy_linear.1} parent=1 // pred_region
      _
    $region21: #{noisy_linear.1} parent=1 // pred_fallthru
      _
    %p21 = scmp.eq.s32.totalorder 0, 0
    // Predicated region
    $region22: #{noisy_linear.1} parent=1 // pred_check
      %p22 = pneg %p21
    $region23: #{noisy_linear.1} parent=1 // pred_check_branch
      %24 = sbr.rel (%p22) target = $region25
    $region24: #{noisy_linear.1} parent=1 // pred_region
      %25 = vst [vmem:[#allocation2] sm:$0xff] 0.0
    $region25: #{noisy_linear.1} parent=1 // pred_fallthru
      _
    %v26 = vld [vmem:[%s1] sm:$0xff]
    %v27 = vld [vmem:[%s1 + $0x8] sm:$0xff]
    %v28 = vld [vmem:[%s1 + $0x10] sm:$0xff]
    %v29 = vld [vmem:[%s1 + $0x18] sm:$0xff]
    %v30 = vld [vmem:[%s1 + $0x20] sm:$0xff]
    %v31 = vld [vmem:[%s1 + $0x28] sm:$0xff]
    %v32 = vld [vmem:[%s1 + $0x30] sm:$0xff]
    %v33 = vld [vmem:[%s1 + $0x38] sm:$0xff]
    %v34 = vld [vmem:[%s1 + $0x40] sm:$0xff]
    %v35 = vld [vmem:[%s1 + $0x48] sm:$0xff]
    %v36 = vld [vmem:[%s1 + $0x50] sm:$0xff]
    %v37 = vld [vmem:[%s1 + $0x58] sm:$0xff]
    %v38 = vld [vmem:[%s1 + $0x60] sm:$0xff]
    %v39 = vld [vmem:[%s1 + $0x68] sm:$0xff]
    %v40 = vld [vmem:[%s1 + $0x70] sm:$0xff]
    %v41 = vld [vmem:[%s1 + $0x78] sm:$0xff]
    %v42 = vld [vmem:[%s2] sm:$0xff]
    %v43 = vld [vmem:[%s2 + $0x8] sm:$0xff]
    %v44 = vld [vmem:[%s2 + $0x10] sm:$0xff]
    %v45 = vld [vmem:[%s2 + $0x18] sm:$0xff]
    %v46 = vld [vmem:[%s2 + $0x20] sm:$0xff]
    %v47 = vld [vmem:[%s2 + $0x28] sm:$0xff]
    %v48 = vld [vmem:[%s2 + $0x30] sm:$0xff]
    %v49 = vld [vmem:[%s2 + $0x38] sm:$0xff]
    %v50 = vld [vmem:[%s2 + $0x40] sm:$0xff]
    %v51 = vld [vmem:[%s2 + $0x48] sm:$0xff]
    %v52 = vld [vmem:[%s2 + $0x50] sm:$0xff]
    %v53 = vld [vmem:[%s2 + $0x58] sm:$0xff]
    %v54 = vld [vmem:[%s2 + $0x60] sm:$0xff]
    %v55 = vld [vmem:[%s2 + $0x68] sm:$0xff]
    %v56 = vld [vmem:[%s2 + $0x70] sm:$0xff]
    %v57 = vld [vmem:[%s2 + $0x78] sm:$0xff]
    %v58 = vld [vmem:[%s3] sm:$0xff]
    %v59 = vld [vmem:[%s3 + $0x8] sm:$0xff]
    %v60 = vld [vmem:[%s3 + $0x10] sm:$0xff]
    %v61 = vld [vmem:[%s3 + $0x18] sm:$0xff]
    %v62 = vld [vmem:[%s3 + $0x20] sm:$0xff]
    %v63 = vld [vmem:[%s3 + $0x28] sm:$0xff]
    %v64 = vld [vmem:[%s3 + $0x30] sm:$0xff]
    %v65 = vld [vmem:[%s3 + $0x38] sm:$0xff]
    %v66 = vld [vmem:[%s3 + $0x40] sm:$0xff]
    %v67 = vld [vmem:[%s3 + $0x48] sm:$0xff]
    %v68 = vld [vmem:[%s3 + $0x50] sm:$0xff]
    %v69 = vld [vmem:[%s3 + $0x58] sm:$0xff]
    %v70 = vld [vmem:[%s3 + $0x60] sm:$0xff]
    %v71 = vld [vmem:[%s3 + $0x68] sm:$0xff]
    %v72 = vld [vmem:[%s3 + $0x70] sm:$0xff]
    %v73 = vld [vmem:[%s3 + $0x78] sm:$0xff]
    %v74 = vmul.f32 %v42, %v58
    %v75 = vmul.f32 %v43, %v59
    %v76 = vmul.f32 %v44, %v60
    %v77 = vmul.f32 %v45, %v61
    %v78 = vmul.f32 %v46, %v62
    %v79 = vmul.f32 %v47, %v63
    %v80 = vmul.f32 %v48, %v64
    %v81 = vmul.f32 %v49, %v65
    %v82 = vmul.f32 %v50, %v66
    %v83 = vmul.f32 %v51, %v67
    %v84 = vmul.f32 %v52, %v68
    %v85 = vmul.f32 %v53, %v69
    %v86 = vmul.f32 %v54, %v70
    %v87 = vmul.f32 %v55, %v71
    %v88 = vmul.f32 %v56, %v72
    %v89 = vmul.f32 %v57, %v73
    %v90 = vadd.f32 %v26, %v74
    %v91 = vadd.f32 %v27, %v75
    %v92 = vadd.f32 %v28, %v76
    %v93 = vadd.f32 %v29, %v77
    %v94 = vadd.f32 %v30, %v78
    %v95 = vadd.f32 %v31, %v79
    %v96 = vadd.f32 %v32, %v80
    %v97 = vadd.f32 %v33, %v81
    %v98 = vadd.f32 %v34, %v82
    %v99 = vadd.f32 %v35, %v83
    %v100 = vadd.f32 %v36, %v84
    %v101 = vadd.f32 %v37, %v85
    %v102 = vadd.f32 %v38, %v86
    %v103 = vadd.f32 %v39, %v87
    %v104 = vadd.f32 %v40, %v88
    %v105 = vadd.f32 %v41, %v89
    %v106 = vld [vmem:[#allocation2] sm:$0xff]
    %v107 = vld [vmem:[%s0] sm:$0xff]
    %108 = vmatprep.subr.mxu0 0.0
    %109 = vmatpush1.xpose.msra.mxu0 %v105
    %110 = vmatprep.subr.mxu0 0.0
    %111 = vmatpush1.xpose.msra.mxu0 %v104
    %112 = vmatprep.subr.mxu0 0.0
    %113 = vmatpush1.xpose.msra.mxu0 %v103
    %114 = vmatprep.subr.mxu0 0.0
    %115 = vmatpush1.xpose.msra.mxu0 %v102
    %116 = vmatprep.subr.mxu0 0.0
    %117 = vmatpush1.xpose.msra.mxu0 %v101
    %118 = vmatprep.subr.mxu0 0.0
    %119 = vmatpush1.xpose.msra.mxu0 %v100
    %120 = vmatprep.subr.mxu0 0.0
    %121 = vmatpush1.xpose.msra.mxu0 %v99
    %122 = vmatprep.subr.mxu0 0.0
    %123 = vmatpush1.xpose.msra.mxu0 %v98
    %124 = vmatprep.subr.mxu0 0.0
    %125 = vmatpush1.xpose.msra.mxu0 %v97
    %126 = vmatprep.subr.mxu0 0.0
    %127 = vmatpush1.xpose.msra.mxu0 %v96
    %128 = vmatprep.subr.mxu0 0.0
    %129 = vmatpush1.xpose.msra.mxu0 %v95
    %130 = vmatprep.subr.mxu0 0.0
    %131 = vmatpush1.xpose.msra.mxu0 %v94
    %132 = vmatprep.subr.mxu0 0.0
    %133 = vmatpush1.xpose.msra.mxu0 %v93
    %134 = vmatprep.subr.mxu0 0.0
    %135 = vmatpush1.xpose.msra.mxu0 %v92
    %136 = vmatprep.subr.mxu0 0.0
    %137 = vmatpush1.xpose.msra.mxu0 %v91
    %138 = vmatprep.subr.mxu0 0.0
    %139 = vmatpush1.xpose.msra.mxu0 %v90
    %140 = vmatprep.subr.mxu0 0.0
    %141 = vmatpush2.xpose.msra.mxu0 0.0
    %142 = vmatprep.subr.mxu0 0.0
    %143 = vmatpush2.xpose.msra.mxu0 0.0
    %144 = vmatprep.subr.mxu0 0.0
    %145 = vmatpush2.xpose.msra.mxu0 0.0
    %146 = vmatprep.subr.mxu0 0.0
    %147 = vmatpush2.xpose.msra.mxu0 0.0
    %148 = vmatprep.subr.mxu0 0.0
    %149 = vmatpush2.xpose.msra.mxu0 0.0
    %150 = vmatprep.subr.mxu0 0.0
    %151 = vmatpush2.xpose.msra.mxu0 0.0
    %152 = vmatprep.subr.mxu0 0.0
    %153 = vmatpush2.xpose.msra.mxu0 0.0
    %154 = vmatprep.subr.mxu0 0.0
    %155 = vmatpush2.xpose.msra.mxu0 0.0
    %156 = vmatprep.subr.mxu0 0.0
    %157 = vmatpush2.xpose.msra.mxu0 0.0
    %158 = vmatprep.subr.mxu0 0.0
    %159 = vmatpush2.xpose.msra.mxu0 0.0
    %160 = vmatprep.subr.mxu0 0.0
    %161 = vmatpush2.xpose.msra.mxu0 0.0
    %162 = vmatprep.subr.mxu0 0.0
    %163 = vmatpush2.xpose.msra.mxu0 0.0
    %164 = vmatprep.subr.mxu0 0.0
    %165 = vmatpush2.xpose.msra.mxu0 0.0
    %166 = vmatprep.subr.mxu0 0.0
    %167 = vmatpush2.xpose.msra.mxu0 0.0
    %168 = vmatprep.subr.mxu0 0.0
    %169 = vmatpush2.xpose.msra.mxu0 0.0
    %170 = vmatprep.subr.mxu0 0.0
    %171 = vmatpush2.xpose.msra.mxu0 0.0
    %172 = vmatprep.mubr.f32.mxu0 0.0
    %173 = vmatmul.mubr.f32.gmra.mxu0 %v107
    %v174 = vpop.f32.mrf.mxu0
    %v175 = vadd.f32 0.0, %v174
    %v176 = vpop.f32.mrf.mxu0
    %177 = vdwg.mxu0
    %v178 = vadd.f32 %v106, %v175
    %179 = vst [vmem:[#allocation2] sm:$0xff] %v178
    // Predicated region
    $region26: #{noisy_linear.1} parent=1 // pred_check
      %p180 = pneg %p21
    $region27: #{noisy_linear.1} parent=1 // pred_check_branch
      %182 = sbr.rel (%p180) target = $region29
    $region28: #{noisy_linear.1} parent=1 // pred_region
      %v183 = vld [vmem:[%s4] sm:$0x7]
      %v185 = vrot.slane %v183, 1
      %v187 = vmul.f32 %v183, %v185
      %v189 = vrot.slane %v187, 1
      %v191 = vadd.f32 %v183, %v189
      %v192 = vld [vmem:[#allocation2] sm:$0xff]
      %v193 = vlaneseq
      %v194 = vshrl.u32 %v193, 7
      %v195 = vsub.s32 0, %v194
      %v196 = vrot.slane %v191, %v195
      %v197 = vadd.f32 %v192, %v196
      %198 = vst [vmem:[#allocation3] sm:$0xff] %v197
    $region29: #{noisy_linear.1} parent=1 // pred_fallthru
      _
    // Predicated region
    $region30: #{noisy_linear.1} parent=1 // pred_check
      _
    $region31: #{noisy_linear.1} parent=1 // pred_check_branch
      %200 = sbr.rel (0) target = $region33
    $region32: #{noisy_linear.1} parent=1 // pred_region
      %s202 = ssub.s32 128, 128
      %203 = vsyncadd [#allocation4], %s202
      %s205 = sshll.u32 [#allocation3], 4
      %s206 = int_to_ptr.vmem [resolvable:$true] %s205
      %208 = dma.vmem_to_hbm [thread:$0]  %s206, 128, %s5, [#allocation4]
    $region33: #{noisy_linear.1} parent=1 // pred_fallthru
      _
    // Predicated region
    $region34: #{noisy_linear.1} parent=1 // pred_check
      _
    $region35: #{noisy_linear.1} parent=1 // pred_check_branch
      %210 = sbr.rel (0) target = $region37
    $region36: #{noisy_linear.1} parent=1 // pred_region
      %211 = dma.done [#allocation4], 128
    $region37: #{noisy_linear.1} parent=1 // pred_fallthru
      _
    %212 = vsyncpa [#allocation4], 1

</llo_original>
